<compile_context>
chip_gen: v7x
topology: tpu7x:2x2x1
jax: 0.10.0
libtpu: 0.0.40
codegen_flags: <defaults>
</compile_context>

<pallas_src>
import functools

import jax
import jax.numpy as jnp
from jax import lax
from jax.experimental import pallas as pl
from jax.experimental.pallas import tpu as pltpu

LANE = 128        # lane-dense last dim -> unmasked vld/vst
SUBLANE = 8       # f32 sublane tiling; accumulator slab is (8, 128)
CHUNK_ROWS = 512  # rows per in-kernel accumulation chunk (256 KiB f32)


def _tpu_generation_defaults():
    """(parts, tm_max_rows) chosen from the attached TPU generation."""
    kind = ""
    try:
        kind = (jax.devices()[0].device_kind or "").lower()
    except Exception:
        pass
    if "v7" in kind or "7x" in kind:
        # v7x: 2 TensorCores/chip, ~3.2 TB/s HBM.  Use both cores and the
        # largest tile: 4 MiB f32 blocks, 16 MiB double-buffered << 64 MiB VMEM.
        return 2, 8192
    # v5e / v6e (single TensorCore): 2 MiB f32 blocks already amortize the
    # ~0.35 us per-step overhead to <15% and stay friendly to scoped VMEM.
    return 1, 4096


def _mse_partial_kernel(xh_ref, x_ref, out_ref, *, tm, chunk, n_chunks,
                        valid_rows, needs_mask):
    """Accumulate per-part partial sums of (x_hat - x)^2 into an (8, 128) slab.

    Grid = (parts, steps): axis 0 'parallel' (one resident (8,128) output block
    per part / TensorCore), axis 1 'arbitrary' reduction over row tiles.  The
    output block is the accumulator; the final cross-lane reduce and the divide
    by the element count happen once in the wrapper.
    """
    j = pl.program_id(1)

    @pl.when(j == 0)
    def _():
        out_ref[...] = jnp.zeros_like(out_ref)

    def sq_diff_sum(row0):
        # (chunk, 128) slice; cast in-kernel so low-precision inputs (bf16)
        # stay narrow over HBM on this mem-bound path.
        xh = xh_ref[0, pl.ds(row0, chunk), :].astype(jnp.float32)
        xv = x_ref[0, pl.ds(row0, chunk), :].astype(jnp.float32)
        d = xh - xv
        if needs_mask:
            # Last grid block is partial: rows >= valid_rows contain garbage
            # (Pallas does not zero the OOB region of a boundary block).
            rows = (lax.broadcasted_iota(jnp.int32, (chunk, LANE), 0)
                    + j * tm + row0)
            d = jnp.where(rows < valid_rows, d, 0.0)
        d2 = d * d
        # VPU-only reduction: sum groups of 8 rows (full-vreg adds, no XLU).
        return jnp.sum(d2.reshape(chunk // SUBLANE, SUBLANE, LANE), axis=0)

    if n_chunks == 1:
        out_ref[...] += sq_diff_sum(0)
    else:
        def body(c, acc):
            return acc + sq_diff_sum(pl.multiple_of(c * chunk, SUBLANE))
        out_ref[...] += lax.fori_loop(
            0, n_chunks, body, jnp.zeros((SUBLANE, LANE), jnp.float32),
            unroll=2)


def mse_loss(x_hat, x):
    """mean((x_hat - x)^2) over all elements via a tiled Pallas reduction."""
    assert x_hat.shape == x.shape, (x_hat.shape, x.shape)
    total = int(x.size)
    if total == 0:
        return jnp.float32(0.0)

    xh_flat = x_hat.reshape(-1)
    x_flat = x.reshape(-1)

    rows, rem = divmod(total, LANE)
    if rows < SUBLANE:
        # Tiny tensor: a kernel launch is pure overhead; do it inline.
        d = xh_flat.astype(jnp.float32) - x_flat.astype(jnp.float32)
        return jnp.sum(d * d) / jnp.float32(total)

    if rem:
        # Rare path: element count not a multiple of 128.  Zero-pad only to the
        # next lane boundary (zeros add 0 to the SSE; divisor stays `total`).
        # TODO(synk): a manual-DMA (memory_space=pl.ANY) path would avoid this
        # copy for huge odd-sized tensors; not worth it for typical NCHW shapes.
        pad = LANE - rem
        xh_flat = jnp.pad(xh_flat, (0, pad))
        x_flat = jnp.pad(x_flat, (0, pad))
        rows += 1

    parts, tm_max = _tpu_generation_defaults()
    if parts > 1 and (rows % parts != 0 or rows // parts < SUBLANE):
        parts = 1                       # keep the reshape zero-copy
    r = rows // parts                   # rows handled per part

    # Row tile: tm = n_chunks * chunk, multiple of 8, <= r (so block <= array).
    if r >= CHUNK_ROWS:
        chunk = CHUNK_ROWS
        n_chunks = min(tm_max // CHUNK_ROWS, r // CHUNK_ROWS)
    else:
        chunk = (r // SUBLANE) * SUBLANE
        n_chunks = 1
    tm = chunk * n_chunks
    steps = -(-r // tm)
    needs_mask = (r % tm) != 0          # final block partial -> mask OOB rows

    # Zero-copy views of the flat arrays (no pad, no slice on the hot path).
    xh3 = xh_flat.reshape(parts, r, LANE)
    x3 = x_flat.reshape(parts, r, LANE)

    in_bytes = x_hat.dtype.itemsize + x.dtype.itemsize
    block_bytes = tm * LANE * in_bytes              # both inputs, one buffer
    vmem_limit = min(max(2 * block_bytes + (8 << 20), 16 << 20), 48 << 20)

    kernel = functools.partial(
        _mse_partial_kernel, tm=tm, chunk=chunk, n_chunks=n_chunks,
        valid_rows=r, needs_mask=needs_mask)

    partials = pl.pallas_call(
        kernel,
        out_shape=jax.ShapeDtypeStruct((parts * SUBLANE, LANE), jnp.float32),
        grid=(parts, steps),
        in_specs=[
            pl.BlockSpec((1, tm, LANE), lambda c, j: (c, j, 0)),
            pl.BlockSpec((1, tm, LANE), lambda c, j: (c, j, 0)),
        ],
        out_specs=pl.BlockSpec((SUBLANE, LANE), lambda c, j: (c, 0)),
        compiler_params=pltpu.CompilerParams(
            dimension_semantics=("parallel", "arbitrary"),
            vmem_limit_bytes=int(vmem_limit)),
        cost_estimate=pl.CostEstimate(
            flops=3 * total,
            transcendentals=0,
            bytes_accessed=int(total * in_bytes + parts * SUBLANE * LANE * 4)),
    )(xh3, x3)

    # Final cross-lane reduce + mean over parts*8*128 partials: tiny, XLA-side.
    return jnp.sum(partials) / jnp.float32(total)


def denoiser_loss(**kwargs):
    """Forward pass of DenoiserLoss: {'loss': MSELoss()(x_hat, x)}."""
    x = kwargs["x"]
    x_hat = kwargs["x_hat"]
    return {"loss": mse_loss(x_hat, x)}


def denoiser_loss_ref(**kwargs):
    x = kwargs["x"].astype(jnp.float32)
    x_hat = kwargs["x_hat"].astype(jnp.float32)
    return {"loss": jnp.mean((x_hat - x) ** 2)}


if __name__ == "__main__":
    key = jax.random.PRNGKey(0)
    k = jax.random.split(key, 6)

    # Case 1: small NCHW, size divisible by 128 -> zero-copy kernel path.
    x = jax.random.normal(k[0], (2, 4, 16, 16), dtype=jnp.float32)
    x_hat = x + 0.1 * jax.random.normal(k[1], x.shape, dtype=jnp.float32)
    out = denoiser_loss(x=x, x_hat=x_hat)
    out = jax.tree_util.tree_map(jax.block_until_ready, out)
    ref = denoiser_loss_ref(x=x, x_hat=x_hat)
    assert jnp.allclose(out["loss"], ref["loss"], rtol=1e-5, atol=1e-6), (
        float(out["loss"]), float(ref["loss"]))

    # Case 2: awkward size (NOT a multiple of 128) -> small-pad fallback + mask.
    x2 = jax.random.normal(k[2], (2, 3, 17, 13), dtype=jnp.float32)
    x2_hat = x2 + 0.05 * jax.random.normal(k[3], x2.shape, dtype=jnp.float32)
    out2 = denoiser_loss(x=x2, x_hat=x2_hat)
    out2 = jax.tree_util.tree_map(jax.block_until_ready, out2)
    ref2 = denoiser_loss_ref(x=x2, x_hat=x2_hat)
    assert jnp.allclose(out2["loss"], ref2["loss"], rtol=1e-5, atol=1e-6), (
        float(out2["loss"]), float(ref2["loss"]))

    # Case 3: larger tensor exercising the multi-step grid, the in-kernel
    # chunk loop (n_chunks > 1 on single-TC chips) and the partial-block mask.
    x3 = jax.random.normal(k[4], (2, 8, 80, 128), dtype=jnp.float32)
    x3_hat = x3 + 0.2 * jax.random.normal(k[5], x3.shape, dtype=jnp.float32)
    out3 = denoiser_loss(x=x3, x_hat=x3_hat)
    out3 = jax.tree_util.tree_map(jax.block_until_ready, out3)
    ref3 = denoiser_loss_ref(x=x3, x_hat=x3_hat)
    assert jnp.allclose(out3["loss"], ref3["loss"], rtol=1e-5, atol=1e-6), (
        float(out3["loss"]), float(ref3["loss"]))

    print("KERNEL_OK")
</pallas_src>

<mosaic_0001>
module attributes {stable_mosaic.version = 11 : i64} {
  func.func @_mse_partial_kernel(%arg0: i32, %arg1: i32, %arg2: memref<1x16x128xf32, #tpu.memory_space<vmem>>, %arg3: memref<1x16x128xf32, #tpu.memory_space<vmem>>, %arg4: memref<8x128xf32, #tpu.memory_space<vmem>>) attributes {dimension_semantics = [#tpu.dimension_semantics<parallel>, #tpu.dimension_semantics<arbitrary>], iteration_bounds = array<i64: 1, 1>, scalar_prefetch = 0 : i64, scratch_operands = 0 : i64, tpu.core_type = #tpu.core_type<tc>, window_params = [{transform_indices = @transform_0, window_bounds = array<i64: 1, 16, 128>}, {transform_indices = @transform_1, window_bounds = array<i64: 1, 16, 128>}, {transform_indices = @transform_2, window_bounds = array<i64: 8, 128>}]} {
    %c0_i32 = arith.constant 0 : i32
    %0 = arith.cmpi eq, %arg1, %c0_i32 : i32
    %1 = arith.extui %0 : i1 to i32
    %c0_i32_0 = arith.constant 0 : i32
    %2 = arith.cmpi ne, %1, %c0_i32_0 : i32
    scf.if %2 {
      %cst_10 = arith.constant 0.000000e+00 : f32
      %14 = vector.broadcast %cst_10 : f32 to vector<8x128xf32>
      %c0_11 = arith.constant 0 : index
      %c0_12 = arith.constant 0 : index
      %15 = vector.load %arg4[%c0_11, %c0_12] : memref<8x128xf32, #tpu.memory_space<vmem>>, vector<8x128xf32>
      tpu.vector_store %arg4[%c0_11, %c0_12], %14 {strides = array<i32>} : memref<8x128xf32, #tpu.memory_space<vmem>>, vector<8x128xf32>,
    } else {
    }
    %c0 = arith.constant 0 : index
    %c0_1 = arith.constant 0 : index
    %3 = vector.load %arg4[%c0, %c0_1] : memref<8x128xf32, #tpu.memory_space<vmem>>, vector<8x128xf32>
    %c0_2 = arith.constant 0 : index
    %c0_3 = arith.constant 0 : index
    %c0_4 = arith.constant 0 : index
    %4 = vector.load %arg2[%c0_2, %c0_3, %c0_4] : memref<1x16x128xf32, #tpu.memory_space<vmem>>, vector<1x16x128xf32>
    %5 = vector.shape_cast %4 : vector<1x16x128xf32> to vector<16x128xf32>
    %c0_5 = arith.constant 0 : index
    %c0_6 = arith.constant 0 : index
    %c0_7 = arith.constant 0 : index
    %6 = vector.load %arg3[%c0_5, %c0_6, %c0_7] : memref<1x16x128xf32, #tpu.memory_space<vmem>>, vector<1x16x128xf32>
    %7 = vector.shape_cast %6 : vector<1x16x128xf32> to vector<16x128xf32>
    %8 = arith.subf %5, %7 : vector<16x128xf32>
    %9 = arith.mulf %8, %8 : vector<16x128xf32>
    %10 = vector.shape_cast %9 : vector<16x128xf32> to vector<2x8x128xf32>
    %cst = arith.constant dense<0.000000e+00> : vector<8x128xf32>
    %11 = vector.multi_reduction <add>, %10, %cst [0] : vector<2x8x128xf32> to vector<8x128xf32>
    %12 = arith.addf %3, %11 : vector<8x128xf32>
    %c0_8 = arith.constant 0 : index
    %c0_9 = arith.constant 0 : index
    %13 = vector.load %arg4[%c0_8, %c0_9] : memref<8x128xf32, #tpu.memory_space<vmem>>, vector<8x128xf32>
    tpu.vector_store %arg4[%c0_8, %c0_9], %12 {strides = array<i32>} : memref<8x128xf32, #tpu.memory_space<vmem>>, vector<8x128xf32>,
    return
  }
  func.func @transform_0(%arg0: i32, %arg1: i32) -> (i32, i32, i32) {
    %c0_i32 = arith.constant 0 : i32
    %c0_i32_0 = arith.constant 0 : i32
    return %arg0, %arg1, %c0_i32 : i32, i32, i32
  }
  func.func @transform_1(%arg0: i32, %arg1: i32) -> (i32, i32, i32) {
    %c0_i32 = arith.constant 0 : i32
    %c0_i32_0 = arith.constant 0 : i32
    return %arg0, %arg1, %c0_i32 : i32, i32, i32
  }
  func.func @transform_2(%arg0: i32, %arg1: i32) -> (i32, i32) {
    %c0_i32 = arith.constant 0 : i32
    %c0_i32_0 = arith.constant 0 : i32
    return %arg0, %c0_i32 : i32, i32
  }
}

</mosaic_0001>

<llo_original>
// kernel: tpu_custom_call.1
$region0: #{tpu_custom_call.1}
  #allocation0 [shape = 'u32[]', space=smem, size = 0x4, offset = 0x4, fixed_abs, tag = 'smem constant byte address 0x4 - core index']
  #allocation1 [shape = 'u32[144,128]{1,0:T(1,128)}', space=vmem, size = 0x12000, scoped, tag = 'internal scratch']
  %s0 = inlined_call_operand.hbm [shape: f32[1,16,128], index: 0, kind: input, shape index: {}]
  %s1 = inlined_call_operand.hbm [shape: f32[1,16,128], index: 1, kind: input, shape index: {}]
  %s2 = inlined_call_operand.hbm [shape: f32[8,128], index: 2, kind: output, shape index: {}]
  %s3 = sld [smem:[#allocation0]]
  $region30: #{tpu_custom_call.1} parent=0
    _
  %s5 = ssub.s32 1, %s3
  %s6 = scalar_select 0, %s5, %s3
  $region1: #{tpu_custom_call.1} parent=0
    #allocation2 [shape = 'u8[8192]{0}', space=vmem, size = 0x2000, scoped, tag = 'input window, operand 0, single buffered']
    #allocation3 [shape = 's32[1]{0}', space=sflag, size = 0x4, scoped, tag = 'scoped memory for tpu_custom_call.1']
    #allocation4 [shape = 's32[1]{0}', space=sflag, size = 0x4, scoped, tag = 'scoped memory for tpu_custom_call.1']
    #allocation5 [shape = 'u8[8192]{0}', space=vmem, size = 0x2000, scoped, tag = 'input window, operand 1, single buffered']
    #allocation6 [shape = 's32[1]{0}', space=sflag, size = 0x4, scoped, tag = 'scoped memory for tpu_custom_call.1']
    #allocation7 [shape = 'u8[4096]{0}', space=vmem, size = 0x1000, scoped, tag = 'output window, operand 0, single buffered']
    %7 = vsyncpa [#allocation3], 0
    %8 = vsyncpa [#allocation6], 0
    %9 = vsyncpa [#allocation4], 0
    // Predicated region
    $region2: #{tpu_custom_call.1} parent=1 // pred_check
      _
    $region3: #{tpu_custom_call.1} parent=1 // pred_check_branch
      %11 = sbr.rel (0) target = $region5
    $region4: #{tpu_custom_call.1} parent=1 // pred_region
      %s13 = ssub.s32 256, 256
      %14 = vsyncadd [#allocation3], %s13
      %s15 = sshll.u32 [#allocation2], 4
      %s16 = int_to_ptr.vmem [resolvable:$true] %s15
      %21 = dma.hbm_to_vmem [thread:$0]  %s0, 256, %s16, [#allocation3], 128, 128, 8
    $region5: #{tpu_custom_call.1} parent=1 // pred_fallthru
      _
    // Predicated region
    $region6: #{tpu_custom_call.1} parent=1 // pred_check
      _
    $region7: #{tpu_custom_call.1} parent=1 // pred_check_branch
      %23 = sbr.rel (0) target = $region9
    $region8: #{tpu_custom_call.1} parent=1 // pred_region
      %s25 = ssub.s32 256, 256
      %26 = vsyncadd [#allocation6], %s25
      %s27 = sshll.u32 [#allocation5], 4
      %s28 = int_to_ptr.vmem [resolvable:$true] %s27
      %33 = dma.hbm_to_vmem [thread:$0]  %s1, 256, %s28, [#allocation6], 128, 128, 8
    $region9: #{tpu_custom_call.1} parent=1 // pred_fallthru
      _
    // Predicated region
    $region10: #{tpu_custom_call.1} parent=1 // pred_check
      _
    $region11: #{tpu_custom_call.1} parent=1 // pred_check_branch
      %35 = sbr.rel (0) target = $region13
    $region12: #{tpu_custom_call.1} parent=1 // pred_region
      %36 = dma.done [#allocation3], 256
    $region13: #{tpu_custom_call.1} parent=1 // pred_fallthru
      _
    // Predicated region
    $region14: #{tpu_custom_call.1} parent=1 // pred_check
      _
    $region15: #{tpu_custom_call.1} parent=1 // pred_check_branch
      %38 = sbr.rel (0) target = $region17
    $region16: #{tpu_custom_call.1} parent=1 // pred_region
      %39 = dma.done [#allocation6], 256
    $region17: #{tpu_custom_call.1} parent=1 // pred_fallthru
      _
    %p40 = scmp.eq.s32.totalorder 0, 0
    // Predicated region
    $region18: #{tpu_custom_call.1} parent=1 // pred_check
      %p41 = pneg %p40
    $region19: #{tpu_custom_call.1} parent=1 // pred_check_branch
      %43 = sbr.rel (%p41) target = $region21
    $region20: #{tpu_custom_call.1} parent=1 // pred_region
      %44 = vst [vmem:[#allocation7] sm:$0xff] 0.0
    $region21: #{tpu_custom_call.1} parent=1 // pred_fallthru
      _
    %v45 = vld [vmem:[#allocation7] sm:$0xff]
    %v46 = vld [vmem:[#allocation2] sm:$0xff]
    %v47 = vld [vmem:[#allocation2 + $0x8] sm:$0xff]
    %v48 = vld [vmem:[#allocation5] sm:$0xff]
    %v49 = vld [vmem:[#allocation5 + $0x8] sm:$0xff]
    %v50 = vsub.f32 %v46, %v48
    %v51 = vsub.f32 %v47, %v49
    %v52 = vmul.f32 %v50, %v50
    %v53 = vmul.f32 %v51, %v51
    %v54 = vadd.f32 %v52, %v53
    %v55 = vadd.f32 %v45, %v54
    %56 = vst [vmem:[#allocation7] sm:$0xff] %v55
    // Predicated region
    $region22: #{tpu_custom_call.1} parent=1 // pred_check
      _
    $region23: #{tpu_custom_call.1} parent=1 // pred_check_branch
      %58 = sbr.rel (0) target = $region25
    $region24: #{tpu_custom_call.1} parent=1 // pred_region
      %s60 = ssub.s32 128, 128
      %61 = vsyncadd [#allocation4], %s60
      %s63 = sshll.u32 [#allocation7], 4
      %s64 = int_to_ptr.vmem [resolvable:$true] %s63
      %66 = dma.vmem_to_hbm [thread:$0]  %s64, 128, %s2, [#allocation4]
    $region25: #{tpu_custom_call.1} parent=1 // pred_fallthru
      _
    // Predicated region
    $region26: #{tpu_custom_call.1} parent=1 // pred_check
      _
    $region27: #{tpu_custom_call.1} parent=1 // pred_check_branch
      %68 = sbr.rel (0) target = $region29
    $region28: #{tpu_custom_call.1} parent=1 // pred_region
      %69 = dma.done [#allocation4], 128
    $region29: #{tpu_custom_call.1} parent=1 // pred_fallthru
      _
    %70 = vsyncpa [#allocation3], 1
    %71 = vsyncpa [#allocation6], 1
    %72 = vsyncpa [#allocation4], 1

</llo_original>
